<compile_context>
chip_gen: v7x
topology: tpu7x:2x2x1
jax: 0.10.0
libtpu: 0.0.40
codegen_flags: <defaults>
</compile_context>

<pallas_src>
import functools

import numpy as np
import jax
import jax.numpy as jnp
from jax.experimental import pallas as pl
from jax.experimental.pallas import tpu as pltpu

_SUBLANE = 8


def _round_up(x, m):
    return ((x + m - 1) // m) * m


def _exemplar_prob_kernel(gate_ref, unmapped_ref, logits_ref, sup_logits_ref,
                          prob_ref):
    # gate_ref      : (S, C) f32 — one-hot super->class membership; invalid
    #                 supers (rows) and invalid classes (columns) are zeroed.
    # unmapped_ref  : (1, C) f32 — 1.0 where a VALID class belongs to no group.
    # logits_ref    : (TR, C) input dtype (f32 or bf16)
    # sup_logits_ref: (TR, S)
    # prob_ref      : (TR, C)
    p = jax.nn.sigmoid(logits_ref[...].astype(jnp.float32))        # (TR, C)
    sp = jax.nn.sigmoid(sup_logits_ref[...].astype(jnp.float32))   # (TR, S)

    # multiplier[c] = sigmoid(sup_s) if class c in (valid) group s,
    #                 1 if c is a valid ungrouped class, 0 otherwise.
    # Stays on the MXU (vector-extended slot); do NOT unroll onto the VPU.
    mult = jnp.dot(sp, gate_ref[...], preferred_element_type=jnp.float32)
    mult = mult + unmapped_ref[...]

    prob_ref[...] = (p * mult).astype(prob_ref.dtype)


def _choose_row_tile(R, C, S, in_bytes, out_bytes):
    """Row-tile size: big (amortize ~0.35us/step), VMEM-safe, >=2 grid steps."""
    if R <= _SUBLANE:
        return R  # single block equal to the full (tiny) row extent
    # Double-buffered streaming footprint per row (logits in + probs out + sup in).
    bytes_per_row = 2 * (C * in_bytes + C * out_bytes + S * in_bytes)
    budget = 12 * 1024 * 1024  # conservative vs. v5e's 16 MiB default scoped VMEM
    tr = min(2048, max(_SUBLANE, budget // max(bytes_per_row, 1)))
    tr = (tr // _SUBLANE) * _SUBLANE
    # Guarantee >= 2 grid steps so v7x's two TensorCores both stream HBM.
    half = _round_up(-(-R // 2), _SUBLANE)
    tr = min(tr, half)
    return max(tr, _SUBLANE)


@functools.partial(jax.jit, static_argnames=("out_dtype",))
def exemplar_prob(pred_logits, pred_super_logits, gate_matrix, unmapped,
                  out_dtype=None):
    """Gated class probabilities: sigmoid + baked super-class gating.

    pred_logits:       (B, Q, C)  f32 or bf16
    pred_super_logits: (B, Q, S)
    gate_matrix:       (S, C) f32, invalid supers/classes pre-zeroed
    unmapped:          (1, C) f32
    returns prob:      (B, Q, C), dtype = out_dtype or pred_logits.dtype
    """
    B, Q, C = pred_logits.shape
    S = pred_super_logits.shape[-1]
    assert gate_matrix.shape == (S, C)
    assert unmapped.shape == (1, C)
    if out_dtype is None:
        out_dtype = pred_logits.dtype

    R = B * Q
    in_bytes = jnp.dtype(pred_logits.dtype).itemsize
    out_bytes = jnp.dtype(out_dtype).itemsize
    TR = _choose_row_tile(R, C, S, in_bytes, out_bytes)
    grid = (pl.cdiv(R, TR),)  # boundary block handled by masked DMA — no pad

    logits2d = pred_logits.reshape(R, C)      # bitcast reshape (free)
    sup2d = pred_super_logits.reshape(R, S)   # bitcast reshape (free)

    grid_spec = pltpu.PrefetchScalarGridSpec(
        num_scalar_prefetch=0,
        grid=grid,
        in_specs=[
            pl.BlockSpec((S, C), lambda r: (0, 0)),     # gate matrix (resident)
            pl.BlockSpec((1, C), lambda r: (0, 0)),     # unmapped indicator
            pl.BlockSpec((TR, C), lambda r: (r, 0)),    # class logits (rows)
            pl.BlockSpec((TR, S), lambda r: (r, 0)),    # super logits (rows)
        ],
        out_specs=pl.BlockSpec((TR, C), lambda r: (r, 0)),
    )

    out = pl.pallas_call(
        _exemplar_prob_kernel,
        out_shape=jax.ShapeDtypeStruct((R, C), out_dtype),
        grid_spec=grid_spec,
        compiler_params=pltpu.CompilerParams(
            dimension_semantics=("parallel",)),
    )(gate_matrix, unmapped, logits2d, sup2d)

    return out.reshape(B, Q, C)               # bitcast reshape (free)


class ExemplarSelectionJAX:
    """JAX/Pallas port of ExemplarSelection.forward / calc_energy_per_image."""

    def __init__(self, num_classes, num_super, prev_cls, cur_cls,
                 invalid_cls_logits, invalid_sup_logits, sup_list, match_dict):
        self.num_classes = num_classes
        self.num_super = num_super
        self.num_seen_classes = prev_cls + cur_cls
        self.invalid_cls_logits = list(invalid_cls_logits)
        self.invalid_sup_logits = list(invalid_sup_logits)
        self.sup_list = sup_list
        self.match_dict = match_dict

        # Host-side (numpy) construction of the baked gate matrix + unmapped
        # indicator at the natural class width (no lane padding needed).
        gate = np.zeros((num_super, num_classes), np.float32)
        covered = np.zeros((num_classes,), np.float32)
        for sup_i, sup in enumerate(sup_list):
            cols = np.asarray(match_dict[sup], dtype=np.int64)
            # The one-hot gating matmul requires disjoint super groups.
            assert cols.size == 0 or covered[cols].max() == 0.0, \
                "super-class groups must be disjoint"
            covered[cols] = 1.0
            gate[sup_i, cols] = 1.0

        unmapped = np.zeros((1, num_classes), np.float32)
        unmapped[0, :] = 1.0 - covered

        # Bake invalid super logits (sigmoid(-1e11)==0 -> zero gate row).
        sup_inv = np.asarray(self.invalid_sup_logits, dtype=np.int64)
        if sup_inv.size:
            gate[sup_inv, :] = 0.0
        # Bake invalid class logits (force final prob to 0 via zero multiplier).
        cls_inv = np.asarray(self.invalid_cls_logits, dtype=np.int64)
        if cls_inv.size:
            gate[:, cls_inv] = 0.0
            unmapped[0, cls_inv] = 0.0

        self.gate_matrix = jnp.asarray(gate)
        self.unmapped = jnp.asarray(unmapped)

    def _matcher(self, outputs, targets):
        # TODO(synk): Hungarian matcher (scipy linear_sum_assignment) has no
        # clean Pallas equivalent; deterministic identity assignment stub.
        indices = []
        for t in targets:
            n = int(np.asarray(t['labels']).shape[0])
            idx = np.arange(n, dtype=np.int64)
            indices.append((idx, idx))
        return indices

    def calc_energy_per_image(self, outputs, targets, indices):
        # Output dtype follows the logits dtype (bf16 in -> bf16 out).
        prob = exemplar_prob(outputs['pred_logits'],
                             outputs['pred_super_logits'],
                             self.gate_matrix, self.unmapped)

        # Batch every (image, query, label) triplet into ONE gather and ONE
        # host transfer (instead of a device_get per image).
        b_idx, q_idx, l_idx, counts = [], [], [], []
        for i, t in enumerate(targets):
            src_idx = np.asarray(indices[i][0], dtype=np.int64)
            labels = np.asarray(t['labels'], dtype=np.int64)
            counts.append(labels.shape[0])
            b_idx.append(np.full((labels.shape[0],), i, dtype=np.int64))
            q_idx.append(src_idx)
            l_idx.append(labels)

        total = int(sum(counts))
        if total:
            b_all = jnp.asarray(np.concatenate(b_idx))
            q_all = jnp.asarray(np.concatenate(q_idx))
            l_all = jnp.asarray(np.concatenate(l_idx))
            scores_all = np.asarray(
                jax.device_get(prob[b_all, q_all, l_all])).astype(np.float32)
        else:
            scores_all = np.zeros((0,), np.float32)

        image_sorted_scores = {}
        off = 0
        for i, t in enumerate(targets):
            n = counts[i]
            image_sorted_scores[int(t['image_id'])] = {
                'labels': np.asarray(t['labels']),
                'scores': scores_all[off:off + n],
            }
            off += n
        return [image_sorted_scores]

    def forward(self, samples, outputs, targets):
        outputs_without_aux = {k: v for k, v in outputs.items()
                               if k != 'aux_outputs' and k != 'enc_outputs'}
        indices = self._matcher(outputs_without_aux, targets)
        return self.calc_energy_per_image(outputs, targets, indices)


def _reference_prob(pred_logits, pred_super_logits, invalid_cls, invalid_sup,
                    sup_list, match_dict):
    """Plain-JAX mirror of the PyTorch loop, for a correctness check."""
    logits = pred_logits.astype(jnp.float32)
    sup = pred_super_logits.astype(jnp.float32)
    if len(invalid_cls):
        logits = logits.at[:, :, jnp.asarray(invalid_cls, jnp.int32)].set(-1e11)
    if len(invalid_sup):
        sup = sup.at[:, :, jnp.asarray(invalid_sup, jnp.int32)].set(-1e11)
    p = jax.nn.sigmoid(logits)
    sp = jax.nn.sigmoid(sup)
    for sup_i, s in enumerate(sup_list):
        cols = jnp.asarray(match_dict[s], jnp.int32)
        p = p.at[:, :, cols].multiply(sp[:, :, sup_i][..., None])
    return p


if __name__ == "__main__":
    B, Q, C, S = 2, 8, 96, 8           # batch, queries, classes, super-classes
    PREV_CLS, CUR_CLS = 40, 40         # num_seen_classes = 80; classes 80..95 invalid
    invalid_cls = list(range(PREV_CLS + CUR_CLS, C))
    invalid_sup = [6, 7]
    sup_list = list(range(S))
    # Disjoint partition: super s owns classes [12s, 12s+12).
    match_dict = {s: list(range(12 * s, 12 * s + 12)) for s in sup_list}

    key = jax.random.PRNGKey(0)
    k1, k2, k3, k4 = jax.random.split(key, 4)
    outputs = {
        'pred_logits': jax.random.normal(k1, (B, Q, C), jnp.float32),
        'pred_super_logits': jax.random.normal(k2, (B, Q, S), jnp.float32),
        'aux_outputs': None,  # stripped, as in the PyTorch forward
    }
    targets = [
        {'image_id': 0, 'labels': jnp.array([3, 17, 45], dtype=jnp.int32)},
        {'image_id': 1, 'labels': jnp.array([60, 85], dtype=jnp.int32)},
    ]

    model = ExemplarSelectionJAX(C, S, PREV_CLS, CUR_CLS, invalid_cls,
                                 invalid_sup, sup_list, match_dict)

    # Pallas hot path (f32 I/O, 2 grid steps) + correctness vs. plain-JAX ref.
    prob = exemplar_prob(outputs['pred_logits'], outputs['pred_super_logits'],
                         model.gate_matrix, model.unmapped)
    jax.block_until_ready(prob)
    ref = _reference_prob(outputs['pred_logits'], outputs['pred_super_logits'],
                          invalid_cls, invalid_sup, sup_list, match_dict)
    assert prob.shape == (B, Q, C)
    assert prob.dtype == jnp.float32
    assert jnp.allclose(prob, ref, atol=1e-5, rtol=1e-5)

    # Non-divisible row count (B*Q = 21, TR = 16) exercises the boundary block.
    logits_odd = jax.random.normal(k3, (3, 7, C), jnp.float32)
    sup_odd = jax.random.normal(k4, (3, 7, S), jnp.float32)
    prob_odd = exemplar_prob(logits_odd, sup_odd,
                             model.gate_matrix, model.unmapped)
    jax.block_until_ready(prob_odd)
    ref_odd = _reference_prob(logits_odd, sup_odd, invalid_cls, invalid_sup,
                              sup_list, match_dict)
    assert prob_odd.shape == (3, 7, C)
    assert jnp.allclose(prob_odd, ref_odd, atol=1e-5, rtol=1e-5)

    # Native bf16 I/O path (bf16 out — halves the output write) — smoke test.
    prob_bf16 = exemplar_prob(outputs['pred_logits'].astype(jnp.bfloat16),
                              outputs['pred_super_logits'].astype(jnp.bfloat16),
                              model.gate_matrix, model.unmapped)
    jax.block_until_ready(prob_bf16)
    assert prob_bf16.dtype == jnp.bfloat16
    assert jnp.allclose(prob_bf16.astype(jnp.float32), ref, atol=3e-2)

    # Full forward (matcher stub + batched per-image score gathering).
    result = model.forward(None, outputs, targets)
    assert isinstance(result, list) and len(result[0]) == B

    print("KERNEL_OK")
</pallas_src>

<mosaic_0001>
module attributes {stable_mosaic.version = 11 : i64} {
  func.func @_exemplar_prob_kernel(%arg0: i32, %arg1: memref<8x96xf32, #tpu.memory_space<vmem>>, %arg2: memref<1x96xf32, #tpu.memory_space<vmem>>, %arg3: memref<8x96xf32, #tpu.memory_space<vmem>>, %arg4: memref<8x8xf32, #tpu.memory_space<vmem>>, %arg5: memref<8x96xf32, #tpu.memory_space<vmem>>) attributes {dimension_semantics = [#tpu.dimension_semantics<parallel>], iteration_bounds = array<i64: 2>, scalar_prefetch = 0 : i64, scratch_operands = 0 : i64, tpu.core_type = #tpu.core_type<tc>, window_params = [{pipeline_mode = #tpu.pipeline_mode<synchronous>, transform_indices = @transform_0, window_bounds = array<i64: 8, 96>}, {pipeline_mode = #tpu.pipeline_mode<synchronous>, transform_indices = @transform_1, window_bounds = array<i64: 1, 96>}, {transform_indices = @transform_2, window_bounds = array<i64: 8, 96>}, {transform_indices = @transform_3, window_bounds = array<i64: 8, 8>}, {transform_indices = @transform_4, window_bounds = array<i64: 8, 96>}]} {
    %c0 = arith.constant 0 : index
    %c0_0 = arith.constant 0 : index
    %0 = vector.load %arg3[%c0, %c0_0] : memref<8x96xf32, #tpu.memory_space<vmem>>, vector<8x96xf32>
    %1 = arith.negf %0 : vector<8x96xf32>
    %2 = math.exp %1 : vector<8x96xf32>
    %cst = arith.constant 1.000000e+00 : f32
    %3 = vector.broadcast %cst : f32 to vector<8x96xf32>
    %4 = arith.addf %3, %2 : vector<8x96xf32>
    %5 = arith.divf %3, %4 : vector<8x96xf32>
    %c0_1 = arith.constant 0 : index
    %c0_2 = arith.constant 0 : index
    %6 = vector.load %arg4[%c0_1, %c0_2] : memref<8x8xf32, #tpu.memory_space<vmem>>, vector<8x8xf32>
    %7 = arith.negf %6 : vector<8x8xf32>
    %8 = math.exp %7 : vector<8x8xf32>
    %cst_3 = arith.constant 1.000000e+00 : f32
    %9 = vector.broadcast %cst_3 : f32 to vector<8x8xf32>
    %10 = arith.addf %9, %8 : vector<8x8xf32>
    %11 = arith.divf %9, %10 : vector<8x8xf32>
    %c0_4 = arith.constant 0 : index
    %c0_5 = arith.constant 0 : index
    %12 = vector.load %arg1[%c0_4, %c0_5] : memref<8x96xf32, #tpu.memory_space<vmem>>, vector<8x96xf32>
    %cst_6 = arith.constant dense<0.000000e+00> : vector<8x96xf32>
    %13 = tpu.matmul %11, %12, %cst_6 {dimension_numbers = #tpu.dot_dimension_numbers<[1], [0], [0], [1], [0, 0, 1, 1], [], []>} : vector<8x8xf32>, vector<8x96xf32>, vector<8x96xf32> -> vector<8x96xf32>
    %c0_7 = arith.constant 0 : index
    %c0_8 = arith.constant 0 : index
    %14 = vector.load %arg2[%c0_7, %c0_8] : memref<1x96xf32, #tpu.memory_space<vmem>>, vector<1x96xf32>
    %15 = vector.broadcast %14 : vector<1x96xf32> to vector<8x96xf32>
    %16 = arith.addf %13, %15 : vector<8x96xf32>
    %17 = arith.mulf %5, %16 : vector<8x96xf32>
    %c0_9 = arith.constant 0 : index
    %c0_10 = arith.constant 0 : index
    %18 = vector.load %arg5[%c0_9, %c0_10] : memref<8x96xf32, #tpu.memory_space<vmem>>, vector<8x96xf32>
    tpu.vector_store %arg5[%c0_9, %c0_10], %17 {strides = array<i32>} : memref<8x96xf32, #tpu.memory_space<vmem>>, vector<8x96xf32>,
    return
  }
  func.func @transform_0(%arg0: i32) -> (i32, i32) {
    %c0_i32 = arith.constant 0 : i32
    %c0_i32_0 = arith.constant 0 : i32
    %c0_i32_1 = arith.constant 0 : i32
    return %c0_i32, %c0_i32_0 : i32, i32
  }
  func.func @transform_1(%arg0: i32) -> (i32, i32) {
    %c0_i32 = arith.constant 0 : i32
    %c0_i32_0 = arith.constant 0 : i32
    %c0_i32_1 = arith.constant 0 : i32
    return %c0_i32, %c0_i32_0 : i32, i32
  }
  func.func @transform_2(%arg0: i32) -> (i32, i32) {
    %c0_i32 = arith.constant 0 : i32
    %c0_i32_0 = arith.constant 0 : i32
    return %arg0, %c0_i32 : i32, i32
  }
  func.func @transform_3(%arg0: i32) -> (i32, i32) {
    %c0_i32 = arith.constant 0 : i32
    %c0_i32_0 = arith.constant 0 : i32
    return %arg0, %c0_i32 : i32, i32
  }
  func.func @transform_4(%arg0: i32) -> (i32, i32) {
    %c0_i32 = arith.constant 0 : i32
    %c0_i32_0 = arith.constant 0 : i32
    return %arg0, %c0_i32 : i32, i32
  }
}

</mosaic_0001>

<llo_original>
// kernel: exemplar_prob.1
$region0: #{exemplar_prob.1}
  #allocation0 [shape = 'u32[]', space=smem, size = 0x4, offset = 0x4, fixed_abs, tag = 'smem constant byte address 0x4 - core index']
  #allocation1 [shape = 'u32[144,128]{1,0:T(1,128)}', space=vmem, size = 0x12000, scoped, tag = 'internal scratch']
  %s0 = inlined_call_operand.vmem [shape: f32[8,96], index: 0, kind: input, shape index: {}]
  %s1 = inlined_call_operand.vmem [shape: f32[1,96], index: 1, kind: input, shape index: {}]
  %s2 = inlined_call_operand.hbm [shape: f32[16,96], index: 2, kind: input, shape index: {}]
  %s3 = inlined_call_operand.hbm [shape: f32[16,8], index: 3, kind: input, shape index: {}]
  %s4 = inlined_call_operand.hbm [shape: f32[16,96], index: 4, kind: output, shape index: {}]
  %s5 = sld [smem:[#allocation0]]
  $region57: #{exemplar_prob.1} parent=0
    _
  %s7 = ssub.s32 1, %s5
  %s8 = scalar_select 0, %s7, %s5
  $region1: #{exemplar_prob.1} parent=0
    #allocation2 [shape = 'u8[8192]{0}', space=vmem, size = 0x2000, scoped, tag = 'input window, operand 2']
    #allocation3 [shape = 's32[2]{0}', space=sflag, size = 0x8, scoped, tag = 'scoped memory for exemplar_prob.1']
    #allocation4 [shape = 's32[2]{0}', space=sflag, size = 0x8, scoped, tag = 'scoped memory for exemplar_prob.1']
    #allocation5 [shape = 'u8[8192]{0}', space=vmem, size = 0x2000, scoped, tag = 'input window, operand 3']
    #allocation6 [shape = 's32[2]{0}', space=sflag, size = 0x8, scoped, tag = 'scoped memory for exemplar_prob.1']
    #allocation7 [shape = 'u8[8192]{0}', space=vmem, size = 0x2000, scoped, tag = 'output window, operand 0']
    %9 = vsyncpa [#allocation3], 0
    %s10 = scalar_lea.sflag [#allocation3], 1
    %11 = vsyncpa %s10, 0
    %12 = vsyncpa [#allocation6], 0
    %s13 = scalar_lea.sflag [#allocation6], 1
    %14 = vsyncpa %s13, 0
    %15 = vsyncpa [#allocation4], 0
    %s16 = scalar_lea.sflag [#allocation4], 1
    %17 = vsyncpa %s16, 0
    loop: start=0, step=1, limit=4
    $region2: #{exemplar_prob.1} parent=1 // loop_pre_header
      _
    $region3: #{exemplar_prob.1} parent=1 // loop_header
      %s19 = sphi 0, %s23
      %p20 = scmp.ge.s32.totalorder %s19, 4
      %s27 = sphi 0, %s27
      %s29 = sphi 0, %s27
      %s30 = sphi 0, %s29
      %s44 = sphi 0, %s30
      %s48 = sphi 0, %s48
      %s50 = sphi 0, %s48
      %s51 = sphi 0, %s50
      %s65 = sphi 0, %s51
      %s71 = sphi 0, %s73
      %s74 = sphi 0, %s71
      %s75 = sphi 0, %s74
      %s91 = sphi 0, %s75
      %s97 = sphi 0, %s99
      %s100 = sphi 0, %s97
      %s101 = sphi 0, %s100
      %s117 = sphi 0, %s101
      %s123 = sphi 0, %s125
      %s126 = sphi 0, %s123
      %s127 = sphi 0, %s126
      %s143 = sphi 0, %s127
    $region4: #{exemplar_prob.1} parent=1 // loop_header_branch
      %22 = sbr.rel (%p20) target = $region8
    $region5: #{exemplar_prob.1} parent=1 // loop_body
      %s24 = ssub.s32 %s19, 1
      %s25 = ssub.s32 %s19, 2
      %s26 = sadd.s32 %s19, 1
      %s28 = sadd.s32 %s27, 1
      %p31 = scmp.eq.s32.totalorder %s19, 1
      %p32 = scmp.ne.s32.totalorder %s27, %s29
      %p33 = scmp.eq.s32.totalorder %s19, 0
      %p34 = por %p32, %p33
      %p35 = scmp.ne.s32.totalorder %s27, %s29
      %p36 = scmp.eq.s32.totalorder %s24, 1
      %p37 = por %p35, %p36
      %p38 = scmp.ne.s32.totalorder %s29, %s30
      %p39 = scmp.eq.s32.totalorder %s24, 0
      %p40 = por %p38, %p39
      %p41 = scmp.ne.s32.totalorder %s29, %s30
      %p42 = scmp.eq.s32.totalorder %s25, 1
      %p43 = por %p41, %p42
      %p45 = scmp.ne.s32.totalorder %s30, %s44
      %p46 = scmp.eq.s32.totalorder %s25, 0
      %p47 = por %p45, %p46
      %s49 = sadd.s32 %s48, 1
      %p52 = scmp.eq.s32.totalorder %s19, 1
      %p53 = scmp.ne.s32.totalorder %s48, %s50
      %p54 = scmp.eq.s32.totalorder %s19, 0
      %p55 = por %p53, %p54
      %p56 = scmp.ne.s32.totalorder %s48, %s50
      %p57 = scmp.eq.s32.totalorder %s24, 1
      %p58 = por %p56, %p57
      %p59 = scmp.ne.s32.totalorder %s50, %s51
      %p60 = scmp.eq.s32.totalorder %s24, 0
      %p61 = por %p59, %p60
      %p62 = scmp.ne.s32.totalorder %s50, %s51
      %p63 = scmp.eq.s32.totalorder %s25, 1
      %p64 = por %p62, %p63
      %p66 = scmp.ne.s32.totalorder %s51, %s65
      %p67 = scmp.eq.s32.totalorder %s25, 0
      %p68 = por %p66, %p67
      %s69 = ssub.s32 %s19, %s26
      %p70 = scmp.eq.s32.totalorder %s69, 0
      %s72 = sadd.s32 %s71, 1
      %s73 = scalar_select %p70, %s71, %s72
      %p76 = pneg %p70
      %p77 = scmp.eq.s32.totalorder %s19, 1
      %p78 = por %p76, %p77
      %p79 = scmp.ne.s32.totalorder %s71, %s74
      %p80 = scmp.eq.s32.totalorder %s19, 0
      %p81 = por %p79, %p80
      %p82 = scmp.ne.s32.totalorder %s71, %s74
      %p83 = scmp.eq.s32.totalorder %s24, 1
      %p84 = por %p82, %p83
      %p85 = scmp.ne.s32.totalorder %s74, %s75
      %p86 = scmp.eq.s32.totalorder %s24, 0
      %p87 = por %p85, %p86
      %p88 = scmp.ne.s32.totalorder %s74, %s75
      %p89 = scmp.eq.s32.totalorder %s25, 1
      %p90 = por %p88, %p89
      %p92 = scmp.ne.s32.totalorder %s75, %s91
      %p93 = scmp.eq.s32.totalorder %s25, 0
      %p94 = por %p92, %p93
      %s95 = ssub.s32 %s19, %s26
      %p96 = scmp.eq.s32.totalorder %s95, 0
      %s98 = sadd.s32 %s97, 1
      %s99 = scalar_select %p96, %s97, %s98
      %p102 = pneg %p96
      %p103 = scmp.eq.s32.totalorder %s19, 1
      %p104 = por %p102, %p103
      %p105 = scmp.ne.s32.totalorder %s97, %s100
      %p106 = scmp.eq.s32.totalorder %s19, 0
      %p107 = por %p105, %p106
      %p108 = scmp.ne.s32.totalorder %s97, %s100
      %p109 = scmp.eq.s32.totalorder %s24, 1
      %p110 = por %p108, %p109
      %p111 = scmp.ne.s32.totalorder %s100, %s101
      %p112 = scmp.eq.s32.totalorder %s24, 0
      %p113 = por %p111, %p112
      %p114 = scmp.ne.s32.totalorder %s100, %s101
      %p115 = scmp.eq.s32.totalorder %s25, 1
      %p116 = por %p114, %p115
      %p118 = scmp.ne.s32.totalorder %s101, %s117
      %p119 = scmp.eq.s32.totalorder %s25, 0
      %p120 = por %p118, %p119
      %s121 = ssub.s32 %s19, %s26
      %p122 = scmp.eq.s32.totalorder %s121, 0
      %s124 = sadd.s32 %s123, 1
      %s125 = scalar_select %p122, %s123, %s124
      %p128 = pneg %p122
      %p129 = scmp.eq.s32.totalorder %s19, 1
      %p130 = por %p128, %p129
      %p131 = scmp.ne.s32.totalorder %s123, %s126
      %p132 = scmp.eq.s32.totalorder %s19, 0
      %p133 = por %p131, %p132
      %p134 = scmp.ne.s32.totalorder %s123, %s126
      %p135 = scmp.eq.s32.totalorder %s24, 1
      %p136 = por %p134, %p135
      %p137 = scmp.ne.s32.totalorder %s126, %s127
      %p138 = scmp.eq.s32.totalorder %s24, 0
      %p139 = por %p137, %p138
      %p140 = scmp.ne.s32.totalorder %s126, %s127
      %p141 = scmp.eq.s32.totalorder %s25, 1
      %p142 = por %p140, %p141
      %p144 = scmp.ne.s32.totalorder %s127, %s143
      %p145 = scmp.eq.s32.totalorder %s25, 0
      %p146 = por %p144, %p145
      %p147 = scmp.le.s32.totalorder 1, %s19
      %p148 = scmp.lt.s32.totalorder %s19, 3
      %p149 = pnand %p147, %p148
      %p150 = pneg %p149
      // Predicated region
      $region9: #{exemplar_prob.1} parent=5 // pred_check
        _
      $region10: #{exemplar_prob.1} parent=5 // pred_check_branch
        %152 = sbr.rel (%p149) target = $region12
      $region11: #{exemplar_prob.1} parent=5 // pred_region
        %s153 = ssub.s32 %s19, 1
        // Predicated region
        $region13: #{exemplar_prob.1} parent=11 // pred_check
          %p154 = pneg %p40
        $region14: #{exemplar_prob.1} parent=11 // pred_check_branch
          %156 = sbr.rel (%p154) target = $region16
        $region15: #{exemplar_prob.1} parent=11 // pred_region
          _
        $region16: #{exemplar_prob.1} parent=11 // pred_fallthru
          _
        // Predicated region
        $region17: #{exemplar_prob.1} parent=11 // pred_check
          %p157 = pneg %p61
        $region18: #{exemplar_prob.1} parent=11 // pred_check_branch
          %159 = sbr.rel (%p157) target = $region20
        $region19: #{exemplar_prob.1} parent=11 // pred_region
          _
        $region20: #{exemplar_prob.1} parent=11 // pred_fallthru
          _
      $region12: #{exemplar_prob.1} parent=5 // pred_fallthru
        _
      %p160 = scmp.lt.s32.totalorder %s19, 2
      // Predicated region
      $region21: #{exemplar_prob.1} parent=5 // pred_check
        %p161 = pneg %p160
      $region22: #{exemplar_prob.1} parent=5 // pred_check_branch
        %163 = sbr.rel (%p161) target = $region24
      $region23: #{exemplar_prob.1} parent=5 // pred_region
        // Predicated region
        $region25: #{exemplar_prob.1} parent=23 // pred_check
          %p164 = pneg %p81
        $region26: #{exemplar_prob.1} parent=23 // pred_check_branch
          %166 = sbr.rel (%p164) target = $region28
        $region27: #{exemplar_prob.1} parent=23 // pred_region
          %s167 = sand.u32 %s71, 1
          %s168 = scalar_lea.sflag [#allocation3], %s167
          %s169 = sand.u32 %s71, 1
          %s170 = smul.addr %s169, 8
          %s171 = scalar_lea.vmem [#allocation2], %s170
          %s173 = ssub.s32 128, 128
          %174 = vsyncadd %s168, %s173
          %s175 = smul.addr %s19, 128
          %s176 = scalar_lea.hbm %s2, %s175
          %s178 = sshll.u32 %s171, 4
          %s179 = int_to_ptr.vmem [resolvable:$true] %s178
          %181 = dma.hbm_to_vmem [thread:$0]  %s176, 128, %s179, %s168
        $region28: #{exemplar_prob.1} parent=23 // pred_fallthru
          _
        // Predicated region
        $region29: #{exemplar_prob.1} parent=23 // pred_check
          %p182 = pneg %p107
        $region30: #{exemplar_prob.1} parent=23 // pred_check_branch
          %184 = sbr.rel (%p182) target = $region32
        $region31: #{exemplar_prob.1} parent=23 // pred_region
          %s185 = sand.u32 %s97, 1
          %s186 = scalar_lea.sflag [#allocation6], %s185
          %s187 = sand.u32 %s97, 1
          %s188 = smul.addr %s187, 8
          %s189 = scalar_lea.vmem [#allocation5], %s188
          %s191 = ssub.s32 128, 128
          %192 = vsyncadd %s186, %s191
          %s193 = smul.addr %s19, 128
          %s194 = scalar_lea.hbm %s3, %s193
          %s196 = sshll.u32 %s189, 4
          %s197 = int_to_ptr.vmem [resolvable:$true] %s196
          %199 = dma.hbm_to_vmem [thread:$0]  %s194, 128, %s197, %s186
        $region32: #{exemplar_prob.1} parent=23 // pred_fallthru
          _
      $region24: #{exemplar_prob.1} parent=5 // pred_fallthru
        _
      %p200 = scmp.le.s32.totalorder 1, %s19
      %p201 = scmp.lt.s32.totalorder %s19, 3
      %p202 = pnand %p200, %p201
      %p203 = pneg %p202
      // Predicated region
      $region33: #{exemplar_prob.1} parent=5 // pred_check
        _
      $region34: #{exemplar_prob.1} parent=5 // pred_check_branch
        %205 = sbr.rel (%p202) target = $region36
      $region35: #{exemplar_prob.1} parent=5 // pred_region
        %s206 = ssub.s32 %s19, 1
        %s207 = sand.u32 %s74, 1
        %s208 = scalar_lea.sflag [#allocation3], %s207
        %s209 = sand.u32 %s74, 1
        %s210 = smul.addr %s209, 8
        %s211 = scalar_lea.vmem [#allocation2], %s210
        // Predicated region
        $region37: #{exemplar_prob.1} parent=35 // pred_check
          %p212 = pneg %p87
        $region38: #{exemplar_prob.1} parent=35 // pred_check_branch
          %214 = sbr.rel (%p212) target = $region40
        $region39: #{exemplar_prob.1} parent=35 // pred_region
          %215 = dma.done %s208, 128
        $region40: #{exemplar_prob.1} parent=35 // pred_fallthru
          _
        %s216 = sand.u32 %s100, 1
        %s217 = scalar_lea.sflag [#allocation6], %s216
        %s218 = sand.u32 %s100, 1
        %s219 = smul.addr %s218, 8
        %s220 = scalar_lea.vmem [#allocation5], %s219
        // Predicated region
        $region41: #{exemplar_prob.1} parent=35 // pred_check
          %p221 = pneg %p113
        $region42: #{exemplar_prob.1} parent=35 // pred_check_branch
          %223 = sbr.rel (%p221) target = $region44
        $region43: #{exemplar_prob.1} parent=35 // pred_region
          %224 = dma.done %s217, 128
        $region44: #{exemplar_prob.1} parent=35 // pred_fallthru
          _
        %p225 = pneg %p40
        %p226 = pneg %p37
        %p227 = pneg %p61
        %p228 = pneg %p58
        %s229 = sand.u32 %s74, 1
        %s230 = scalar_lea.sflag [#allocation3], %s229
        %s231 = sand.u32 %s74, 1
        %s232 = smul.addr %s231, 8
        %s233 = scalar_lea.vmem [#allocation2], %s232
        %p234 = pneg %p87
        %p235 = pneg %p84
        %s236 = sand.u32 %s100, 1
        %s237 = scalar_lea.sflag [#allocation6], %s236
        %s238 = sand.u32 %s100, 1
        %s239 = smul.addr %s238, 8
        %s240 = scalar_lea.vmem [#allocation5], %s239
        %p241 = pneg %p113
        %p242 = pneg %p110
        %p243 = pneg %p139
        %p244 = pneg %p136
        %s245 = sand.u32 %s126, 1
        %s246 = scalar_lea.sflag [#allocation4], %s245
        %s247 = sand.u32 %s126, 1
        %s248 = smul.addr %s247, 8
        %s249 = scalar_lea.vmem [#allocation7], %s248
        %v250 = vld [vmem:[%s211] sm:$0xff]
        %v251 = vxor.u32 %v250, 2147483648
        %v252 = vmul.f32 %v251, 1.442695
        %v253 = vpow.pop %v252
        %v254 = vadd.f32 %v253, 1.0
        %v255 = vrcp.pop %v254
        %v256 = vmul.f32 1.0, %v255
        %v257 = vld [vmem:[%s220] sm:$0xff]
        %v258 = vxor.u32 %v257, 2147483648
        %v259 = vmul.f32 %v258, 1.442695
        %v260 = vpow.pop %v259
        %v261 = vadd.f32 %v260, 1.0
        %v262 = vrcp.pop %v261
        %v263 = vmul.f32 1.0, %v262
        %v264 = vld [vmem:[%s0] sm:$0xff]
        %v265 = vld [vmem:[%s1] sm:$0x1]
        %v267 = vlaneseq
        %v268 = vshrl.u32 %v267, 7
        %v269 = vsub.s32 0, %v268
        %v270 = vrot.slane %v265, %v269
        %vm272 = vcmask 64512
        %v274 = vsel %vm272, %v263, 0
        %276 = vmatprep.subr.mxu0 0.0
        %277 = vmatpush1.msra.mxu0 %v264
        %278 = vmatprep.subr.mxu0 0.0
        %279 = vmatpush1.msra.mxu0 0.0
        %280 = vmatprep.subr.mxu0 0.0
        %281 = vmatpush1.msra.mxu0 0.0
        %282 = vmatprep.subr.mxu0 0.0
        %283 = vmatpush1.msra.mxu0 0.0
        %284 = vmatprep.subr.mxu0 0.0
        %285 = vmatpush1.msra.mxu0 0.0
        %286 = vmatprep.subr.mxu0 0.0
        %287 = vmatpush1.msra.mxu0 0.0
        %288 = vmatprep.subr.mxu0 0.0
        %289 = vmatpush1.msra.mxu0 0.0
        %290 = vmatprep.subr.mxu0 0.0
        %291 = vmatpush1.msra.mxu0 0.0
        %292 = vmatprep.subr.mxu0 0.0
        %293 = vmatpush1.msra.mxu0 0.0
        %294 = vmatprep.subr.mxu0 0.0
        %295 = vmatpush1.msra.mxu0 0.0
        %296 = vmatprep.subr.mxu0 0.0
        %297 = vmatpush1.msra.mxu0 0.0
        %298 = vmatprep.subr.mxu0 0.0
        %299 = vmatpush1.msra.mxu0 0.0
        %300 = vmatprep.subr.mxu0 0.0
        %301 = vmatpush1.msra.mxu0 0.0
        %302 = vmatprep.subr.mxu0 0.0
        %303 = vmatpush1.msra.mxu0 0.0
        %304 = vmatprep.subr.mxu0 0.0
        %305 = vmatpush1.msra.mxu0 0.0
        %306 = vmatprep.subr.mxu0 0.0
        %307 = vmatpush1.msra.mxu0 0.0
        %308 = vmatprep.subr.mxu0 0.0
        %309 = vmatpush1.msra.mxu0 0.0
        %310 = vmatprep.subr.mxu0 0.0
        %311 = vmatpush1.msra.mxu0 0.0
        %312 = vmatprep.subr.mxu0 0.0
        %313 = vmatpush1.msra.mxu0 0.0
        %314 = vmatprep.subr.mxu0 0.0
        %315 = vmatpush1.msra.mxu0 0.0
        %316 = vmatprep.subr.mxu0 0.0
        %317 = vmatpush1.msra.mxu0 0.0
        %318 = vmatprep.subr.mxu0 0.0
        %319 = vmatpush1.msra.mxu0 0.0
        %320 = vmatprep.subr.mxu0 0.0
        %321 = vmatpush1.msra.mxu0 0.0
        %322 = vmatprep.subr.mxu0 0.0
        %323 = vmatpush1.msra.mxu0 0.0
        %324 = vmatprep.subr.mxu0 0.0
        %325 = vmatpush1.msra.mxu0 0.0
        %326 = vmatprep.subr.mxu0 0.0
        %327 = vmatpush1.msra.mxu0 0.0
        %328 = vmatprep.subr.mxu0 0.0
        %329 = vmatpush1.msra.mxu0 0.0
        %330 = vmatprep.subr.mxu0 0.0
        %331 = vmatpush1.msra.mxu0 0.0
        %332 = vmatprep.subr.mxu0 0.0
        %333 = vmatpush1.msra.mxu0 0.0
        %334 = vmatprep.subr.mxu0 0.0
        %335 = vmatpush1.msra.mxu0 0.0
        %336 = vmatprep.subr.mxu0 0.0
        %337 = vmatpush1.msra.mxu0 0.0
        %338 = vmatprep.subr.mxu0 0.0
        %339 = vmatpush1.msra.mxu0 0.0
        %340 = vmatprep.mubr.f32.mxu0 0.0
        %341 = vmatmul.mubr.f32.gmra.mrb[0].mxu0 %v274
        %v342 = vpop.f32.mrb[0].mxu0
        %v343 = vadd.f32 %v270, %v342
        %v344 = vpop.f32.mrb[0].mxu0
        %345 = vdwg.mxu0
        %v346 = vmul.f32 %v256, %v343
        %vm347 = vcmask 785408
        %348 = vst.msk [vmem:[%s249] sm:$0xff] %vm347, %v346
        %s349 = sand.u32 %s126, 1
        %s350 = scalar_lea.sflag [#allocation4], %s349
        %s351 = sand.u32 %s126, 1
        %s352 = smul.addr %s351, 8
        %s353 = scalar_lea.vmem [#allocation7], %s352
        // Predicated region
        $region45: #{exemplar_prob.1} parent=35 // pred_check
          %p354 = pneg %p136
        $region46: #{exemplar_prob.1} parent=35 // pred_check_branch
          %356 = sbr.rel (%p354) target = $region48
        $region47: #{exemplar_prob.1} parent=35 // pred_region
          %s358 = ssub.s32 128, 128
          %359 = vsyncadd %s350, %s358
          %s360 = smul.addr %s24, 128
          %s361 = scalar_lea.hbm %s4, %s360
          %s363 = sshll.u32 %s353, 4
          %s364 = int_to_ptr.vmem [resolvable:$true] %s363
          %366 = dma.vmem_to_hbm [thread:$0]  %s364, 128, %s361, %s350
        $region48: #{exemplar_prob.1} parent=35 // pred_fallthru
          _
      $region36: #{exemplar_prob.1} parent=5 // pred_fallthru
        _
      %p367 = scmp.le.s32.totalorder 2, %s19
      // Predicated region
      $region49: #{exemplar_prob.1} parent=5 // pred_check
        %p368 = pneg %p367
      $region50: #{exemplar_prob.1} parent=5 // pred_check_branch
        %370 = sbr.rel (%p368) target = $region52
      $region51: #{exemplar_prob.1} parent=5 // pred_region
        %s371 = ssub.s32 %s19, 2
        // Predicated region
        $region53: #{exemplar_prob.1} parent=51 // pred_check
          %p372 = pneg %p142
        $region54: #{exemplar_prob.1} parent=51 // pred_check_branch
          %374 = sbr.rel (%p372) target = $region56
        $region55: #{exemplar_prob.1} parent=51 // pred_region
          %s375 = sand.u32 %s127, 1
          %s376 = scalar_lea.sflag [#allocation4], %s375
          %s377 = sand.u32 %s127, 1
          %s378 = smul.addr %s377, 8
          %s379 = scalar_lea.vmem [#allocation7], %s378
          %380 = dma.done %s376, 128
        $region56: #{exemplar_prob.1} parent=51 // pred_fallthru
          _
      $region52: #{exemplar_prob.1} parent=5 // pred_fallthru
        _
    $region6: #{exemplar_prob.1} parent=1 // loop_footer
      %s23 = sadd.s32 1, %s19
    $region7: #{exemplar_prob.1} parent=1 // loop_footer_branch
      %18 = sbr.rel target = $region3
    $region8: #{exemplar_prob.1} parent=1 // loop_exit
      _
    %381 = vsyncpa [#allocation3], 1
    %s382 = scalar_lea.sflag [#allocation3], 1
    %383 = vsyncpa %s382, 1
    %384 = vsyncpa [#allocation6], 1
    %s385 = scalar_lea.sflag [#allocation6], 1
    %386 = vsyncpa %s385, 1
    %387 = vsyncpa [#allocation4], 1
    %s388 = scalar_lea.sflag [#allocation4], 1
    %389 = vsyncpa %s388, 1

</llo_original>
